<compile_context>
chip_gen: v7x
topology: tpu7x:2x2x1
jax: 0.10.0
libtpu: 0.0.40
codegen_flags: <defaults>
</compile_context>

<pallas_src>
import jax
import jax.numpy as jnp
from jax.experimental import pallas as pl
from jax.experimental.pallas import tpu as pltpu


def autoencoder_kernel(x_ref, w12_ref, b12_ref, w34_ref, b34_ref, o_ref):
    x = x_ref[...]

    # Fused encoder (Linear∘Linear) + ReLU.  f32 accumulate on the MXU.
    h = jnp.dot(x, w12_ref[...], preferred_element_type=jnp.float32) + b12_ref[...]
    h = jnp.maximum(h, 0.0)

    # Fused decoder (Linear∘Linear).
    y = (jnp.dot(h.astype(w34_ref.dtype), w34_ref[...],
                 preferred_element_type=jnp.float32) + b34_ref[...])

    o_ref[...] = y.astype(o_ref.dtype)


def autoencoder_forward(x, params, *, tm=512):
    """x: [batch, input_dim]. params: dict of (in,out) weights + (1,out) biases.

    Returns decoder(encoder(x)), identical math to the PyTorch module.
    """
    batch, input_dim = x.shape
    dtype = x.dtype

    # --- one-time algebraic fusion of consecutive Linears (exact: ReLU is
    # only between layer 2 and 3). Tiny XLA-side matmuls. ---
    w12 = params["w1"] @ params["w2"]                     # (input_dim, hidden)
    b12 = params["b1"] @ params["w2"] + params["b2"]      # (1, hidden)
    w34 = params["w3"] @ params["w4"]                     # (hidden, input_dim)
    b34 = params["b3"] @ params["w4"] + params["b4"]      # (1, input_dim)
    hidden = w12.shape[1]

    w12, b12, w34, b34 = (a.astype(dtype) for a in (w12, b12, w34, b34))

    # --- batch tiling: clamp tile for tiny batches, pad to a tile multiple ---
    assert tm % 8 == 0, "tm must be a multiple of 8 (sublane granularity)"
    aligned_batch = ((batch + 7) // 8) * 8
    tm_eff = min(tm, aligned_batch)
    num_tiles = pl.cdiv(batch, tm_eff)
    padded_batch = num_tiles * tm_eff
    if padded_batch != batch:
        x = jnp.pad(x, ((0, padded_batch - batch), (0, 0)))

    def full_spec(arr):
        # Whole (grid-invariant) array resident in VMEM for every grid step.
        ndim = arr.ndim
        return pl.BlockSpec(arr.shape, lambda i, _n=ndim: (0,) * _n)

    itemsize = jnp.dtype(dtype).itemsize
    cost = pl.CostEstimate(
        flops=2 * padded_batch * (input_dim * hidden + hidden * input_dim),
        transcendentals=0,
        bytes_accessed=(padded_batch * input_dim * itemsize * 2          # x + out
                        + (w12.size + b12.size + w34.size + b34.size) * itemsize),
    )

    out = pl.pallas_call(
        autoencoder_kernel,
        out_shape=jax.ShapeDtypeStruct((padded_batch, input_dim), dtype),
        grid_spec=pltpu.PrefetchScalarGridSpec(
            num_scalar_prefetch=0,
            grid=(num_tiles,),
            in_specs=[
                pl.BlockSpec((tm_eff, input_dim), lambda i: (i, 0)),  # x tile
                full_spec(w12), full_spec(b12),
                full_spec(w34), full_spec(b34),
            ],
            out_specs=pl.BlockSpec((tm_eff, input_dim), lambda i: (i, 0)),
        ),
        compiler_params=pltpu.CompilerParams(
            dimension_semantics=("parallel",)),
        cost_estimate=cost,
    )(x, w12, b12, w34, b34)

    if padded_batch != batch:
        out = out[:batch]
    return out


def init_params(key, input_dim, encoding_dim):
    """Deterministic init mimicking nn.Linear's uniform(-1/sqrt(fan_in), 1/sqrt(fan_in))."""
    hidden = encoding_dim // 2
    dims = [(input_dim, encoding_dim),   # encoder L1
            (encoding_dim, hidden),      # encoder L2
            (hidden, encoding_dim),      # decoder L1
            (encoding_dim, input_dim)]   # decoder L2
    params = {}
    for idx, (fan_in, fan_out) in enumerate(dims, start=1):
        key, kw, kb = jax.random.split(key, 3)
        bound = 1.0 / jnp.sqrt(jnp.float32(fan_in))
        params[f"w{idx}"] = jax.random.uniform(
            kw, (fan_in, fan_out), jnp.float32, -bound, bound)
        params[f"b{idx}"] = jax.random.uniform(
            kb, (1, fan_out), jnp.float32, -bound, bound)
    return params


def reference_forward(x, p):
    """Unfused pure-JAX reference matching the PyTorch module layer-by-layer."""
    h = x @ p["w1"] + p["b1"]
    h = h @ p["w2"] + p["b2"]
    h = jnp.maximum(h, 0.0)
    h = h @ p["w3"] + p["b3"]
    return h @ p["w4"] + p["b4"]


if __name__ == "__main__":
    input_dim = 64
    encoding_dim = 32
    batch = 16   # deliberately not a multiple of the default tile; exercises clamp/pad path

    key = jax.random.PRNGKey(0)
    key, kx = jax.random.split(key)
    x = jax.random.normal(kx, (batch, input_dim), jnp.float32)
    params = init_params(key, input_dim, encoding_dim)

    out = autoencoder_forward(x, params)
    out = jax.block_until_ready(out)

    ref = reference_forward(x, params)
    assert out.shape == (batch, input_dim)
    # Fused-weight rounding order differs slightly from the layer-by-layer
    # reference, so use a slightly looser (still tight) tolerance.
    assert jnp.allclose(out, ref, atol=1e-4, rtol=1e-4)

    print("KERNEL_OK")
</pallas_src>

<mosaic_0001>
module attributes {stable_mosaic.version = 11 : i64} {
  func.func @autoencoder_kernel(%arg0: i32, %arg1: memref<16x64xf32, #tpu.memory_space<vmem>>, %arg2: memref<64x16xf32, #tpu.memory_space<vmem>>, %arg3: memref<1x16xf32, #tpu.memory_space<vmem>>, %arg4: memref<16x64xf32, #tpu.memory_space<vmem>>, %arg5: memref<1x64xf32, #tpu.memory_space<vmem>>, %arg6: memref<16x64xf32, #tpu.memory_space<vmem>>) attributes {dimension_semantics = [#tpu.dimension_semantics<parallel>], iteration_bounds = array<i64: 1>, scalar_prefetch = 0 : i64, scratch_operands = 0 : i64, tpu.core_type = #tpu.core_type<tc>, window_params = [{transform_indices = @transform_0, window_bounds = array<i64: 16, 64>}, {pipeline_mode = #tpu.pipeline_mode<synchronous>, transform_indices = @transform_1, window_bounds = array<i64: 64, 16>}, {pipeline_mode = #tpu.pipeline_mode<synchronous>, transform_indices = @transform_2, window_bounds = array<i64: 1, 16>}, {pipeline_mode = #tpu.pipeline_mode<synchronous>, transform_indices = @transform_3, window_bounds = array<i64: 16, 64>}, {pipeline_mode = #tpu.pipeline_mode<synchronous>, transform_indices = @transform_4, window_bounds = array<i64: 1, 64>}, {transform_indices = @transform_5, window_bounds = array<i64: 16, 64>}]} {
    %c0 = arith.constant 0 : index
    %c0_0 = arith.constant 0 : index
    %0 = vector.load %arg1[%c0, %c0_0] : memref<16x64xf32, #tpu.memory_space<vmem>>, vector<16x64xf32>
    %c0_1 = arith.constant 0 : index
    %c0_2 = arith.constant 0 : index
    %1 = vector.load %arg2[%c0_1, %c0_2] : memref<64x16xf32, #tpu.memory_space<vmem>>, vector<64x16xf32>
    %cst = arith.constant dense<0.000000e+00> : vector<16x16xf32>
    %2 = tpu.matmul %0, %1, %cst {dimension_numbers = #tpu.dot_dimension_numbers<[1], [0], [0], [1], [0, 0, 1, 1], [], []>} : vector<16x64xf32>, vector<64x16xf32>, vector<16x16xf32> -> vector<16x16xf32>
    %c0_3 = arith.constant 0 : index
    %c0_4 = arith.constant 0 : index
    %3 = vector.load %arg3[%c0_3, %c0_4] : memref<1x16xf32, #tpu.memory_space<vmem>>, vector<1x16xf32>
    %4 = vector.broadcast %3 : vector<1x16xf32> to vector<16x16xf32>
    %5 = arith.addf %2, %4 : vector<16x16xf32>
    %cst_5 = arith.constant 0.000000e+00 : f32
    %6 = vector.broadcast %cst_5 : f32 to vector<16x16xf32>
    %7 = arith.maximumf %5, %6 : vector<16x16xf32>
    %c0_6 = arith.constant 0 : index
    %c0_7 = arith.constant 0 : index
    %8 = vector.load %arg4[%c0_6, %c0_7] : memref<16x64xf32, #tpu.memory_space<vmem>>, vector<16x64xf32>
    %cst_8 = arith.constant dense<0.000000e+00> : vector<16x64xf32>
    %9 = tpu.matmul %7, %8, %cst_8 {dimension_numbers = #tpu.dot_dimension_numbers<[1], [0], [0], [1], [0, 0, 1, 1], [], []>} : vector<16x16xf32>, vector<16x64xf32>, vector<16x64xf32> -> vector<16x64xf32>
    %c0_9 = arith.constant 0 : index
    %c0_10 = arith.constant 0 : index
    %10 = vector.load %arg5[%c0_9, %c0_10] : memref<1x64xf32, #tpu.memory_space<vmem>>, vector<1x64xf32>
    %11 = vector.broadcast %10 : vector<1x64xf32> to vector<16x64xf32>
    %12 = arith.addf %9, %11 : vector<16x64xf32>
    %c0_11 = arith.constant 0 : index
    %c0_12 = arith.constant 0 : index
    %13 = vector.load %arg6[%c0_11, %c0_12] : memref<16x64xf32, #tpu.memory_space<vmem>>, vector<16x64xf32>
    tpu.vector_store %arg6[%c0_11, %c0_12], %12 {strides = array<i32>} : memref<16x64xf32, #tpu.memory_space<vmem>>, vector<16x64xf32>,
    return
  }
  func.func @transform_0(%arg0: i32) -> (i32, i32) {
    %c0_i32 = arith.constant 0 : i32
    %c0_i32_0 = arith.constant 0 : i32
    return %arg0, %c0_i32 : i32, i32
  }
  func.func @transform_1(%arg0: i32) -> (i32, i32) {
    %c0_i32 = arith.constant 0 : i32
    %c0_i32_0 = arith.constant 0 : i32
    %c0_i32_1 = arith.constant 0 : i32
    return %c0_i32, %c0_i32_0 : i32, i32
  }
  func.func @transform_2(%arg0: i32) -> (i32, i32) {
    %c0_i32 = arith.constant 0 : i32
    %c0_i32_0 = arith.constant 0 : i32
    %c0_i32_1 = arith.constant 0 : i32
    return %c0_i32, %c0_i32_0 : i32, i32
  }
  func.func @transform_3(%arg0: i32) -> (i32, i32) {
    %c0_i32 = arith.constant 0 : i32
    %c0_i32_0 = arith.constant 0 : i32
    %c0_i32_1 = arith.constant 0 : i32
    return %c0_i32, %c0_i32_0 : i32, i32
  }
  func.func @transform_4(%arg0: i32) -> (i32, i32) {
    %c0_i32 = arith.constant 0 : i32
    %c0_i32_0 = arith.constant 0 : i32
    %c0_i32_1 = arith.constant 0 : i32
    return %c0_i32, %c0_i32_0 : i32, i32
  }
  func.func @transform_5(%arg0: i32) -> (i32, i32) {
    %c0_i32 = arith.constant 0 : i32
    %c0_i32_0 = arith.constant 0 : i32
    return %arg0, %c0_i32 : i32, i32
  }
}

</mosaic_0001>

<llo_original>
// kernel: tpu_custom_call.1
$region0: #{tpu_custom_call.1}
  #allocation0 [shape = 'u32[]', space=smem, size = 0x4, offset = 0x4, fixed_abs, tag = 'smem constant byte address 0x4 - core index']
  #allocation1 [shape = 'u32[144,128]{1,0:T(1,128)}', space=vmem, size = 0x12000, scoped, tag = 'internal scratch']
  %s0 = inlined_call_operand.vmem [shape: f32[16,64], index: 0, kind: input, shape index: {}]
  %s1 = inlined_call_operand.vmem [shape: f32[64,16], index: 1, kind: input, shape index: {}]
  %s2 = inlined_call_operand.vmem [shape: f32[1,16], index: 2, kind: input, shape index: {}]
  %s3 = inlined_call_operand.vmem [shape: f32[16,64], index: 3, kind: input, shape index: {}]
  %s4 = inlined_call_operand.vmem [shape: f32[1,64], index: 4, kind: input, shape index: {}]
  %s5 = inlined_call_operand.hbm [shape: f32[16,64], index: 5, kind: output, shape index: {}]
  %s6 = sld [smem:[#allocation0]]
  $region30: #{tpu_custom_call.1} parent=0
    _
  %s8 = ssub.s32 1, %s6
  %s9 = scalar_select 0, %s8, %s6
  $region1: #{tpu_custom_call.1} parent=0
    #allocation2 [shape = 'u8[8192]{0}', space=vmem, size = 0x2000, scoped, tag = 'output window, operand 0, single buffered']
    #allocation3 [shape = 's32[1]{0}', space=sflag, size = 0x4, scoped, tag = 'scoped memory for tpu_custom_call.1']
    %10 = vsyncpa [#allocation3], 0
    // Predicated region
    $region2: #{tpu_custom_call.1} parent=1 // pred_check
      _
    $region3: #{tpu_custom_call.1} parent=1 // pred_check_branch
      %12 = sbr.rel (0) target = $region5
    $region4: #{tpu_custom_call.1} parent=1 // pred_region
      _
    $region5: #{tpu_custom_call.1} parent=1 // pred_fallthru
      _
    // Predicated region
    $region6: #{tpu_custom_call.1} parent=1 // pred_check
      _
    $region7: #{tpu_custom_call.1} parent=1 // pred_check_branch
      %14 = sbr.rel (0) target = $region9
    $region8: #{tpu_custom_call.1} parent=1 // pred_region
      _
    $region9: #{tpu_custom_call.1} parent=1 // pred_fallthru
      _
    // Predicated region
    $region10: #{tpu_custom_call.1} parent=1 // pred_check
      _
    $region11: #{tpu_custom_call.1} parent=1 // pred_check_branch
      %16 = sbr.rel (0) target = $region13
    $region12: #{tpu_custom_call.1} parent=1 // pred_region
      _
    $region13: #{tpu_custom_call.1} parent=1 // pred_fallthru
      _
    // Predicated region
    $region14: #{tpu_custom_call.1} parent=1 // pred_check
      _
    $region15: #{tpu_custom_call.1} parent=1 // pred_check_branch
      %18 = sbr.rel (0) target = $region17
    $region16: #{tpu_custom_call.1} parent=1 // pred_region
      _
    $region17: #{tpu_custom_call.1} parent=1 // pred_fallthru
      _
    // Predicated region
    $region18: #{tpu_custom_call.1} parent=1 // pred_check
      _
    $region19: #{tpu_custom_call.1} parent=1 // pred_check_branch
      %20 = sbr.rel (0) target = $region21
    $region20: #{tpu_custom_call.1} parent=1 // pred_region
      _
    $region21: #{tpu_custom_call.1} parent=1 // pred_fallthru
      _
    %v21 = vld [vmem:[%s0] sm:$0xff]
    %v22 = vld [vmem:[%s0 + $0x8] sm:$0xff]
    %v23 = vld [vmem:[%s1] sm:$0xff]
    %v24 = vld [vmem:[%s1 + $0x8] sm:$0xff]
    %v25 = vld [vmem:[%s1 + $0x10] sm:$0xff]
    %v26 = vld [vmem:[%s1 + $0x18] sm:$0xff]
    %v27 = vld [vmem:[%s1 + $0x20] sm:$0xff]
    %v28 = vld [vmem:[%s1 + $0x28] sm:$0xff]
    %v29 = vld [vmem:[%s1 + $0x30] sm:$0xff]
    %v30 = vld [vmem:[%s1 + $0x38] sm:$0xff]
    %v31 = vld [vmem:[%s2] sm:$0x1]
    %v33 = vlaneseq
    %v34 = vshrl.u32 %v33, 7
    %v35 = vsub.s32 0, %v34
    %v36 = vrot.slane %v31, %v35
    %vm38 = vcmask 523264
    %v40 = vsel %vm38, %v21, 0
    %v43 = vsel %vm38, %v22, 0
    %45 = vmatprep.subr.mxu0 0.0
    %46 = vmatpush1.msra.mxu0 %v23
    %47 = vmatprep.subr.mxu0 0.0
    %48 = vmatpush1.msra.mxu0 %v24
    %49 = vmatprep.subr.mxu0 0.0
    %50 = vmatpush1.msra.mxu0 %v25
    %51 = vmatprep.subr.mxu0 0.0
    %52 = vmatpush1.msra.mxu0 %v26
    %53 = vmatprep.subr.mxu0 0.0
    %54 = vmatpush1.msra.mxu0 %v27
    %55 = vmatprep.subr.mxu0 0.0
    %56 = vmatpush1.msra.mxu0 %v28
    %57 = vmatprep.subr.mxu0 0.0
    %58 = vmatpush1.msra.mxu0 %v29
    %59 = vmatprep.subr.mxu0 0.0
    %60 = vmatpush1.msra.mxu0 %v30
    %61 = vmatprep.subr.mxu0 0.0
    %62 = vmatpush1.msra.mxu0 0.0
    %63 = vmatprep.subr.mxu0 0.0
    %64 = vmatpush1.msra.mxu0 0.0
    %65 = vmatprep.subr.mxu0 0.0
    %66 = vmatpush1.msra.mxu0 0.0
    %67 = vmatprep.subr.mxu0 0.0
    %68 = vmatpush1.msra.mxu0 0.0
    %69 = vmatprep.subr.mxu0 0.0
    %70 = vmatpush1.msra.mxu0 0.0
    %71 = vmatprep.subr.mxu0 0.0
    %72 = vmatpush1.msra.mxu0 0.0
    %73 = vmatprep.subr.mxu0 0.0
    %74 = vmatpush1.msra.mxu0 0.0
    %75 = vmatprep.subr.mxu0 0.0
    %76 = vmatpush1.msra.mxu0 0.0
    %77 = vmatprep.subr.mxu0 0.0
    %78 = vmatpush1.msra.mxu0 0.0
    %79 = vmatprep.subr.mxu0 0.0
    %80 = vmatpush1.msra.mxu0 0.0
    %81 = vmatprep.subr.mxu0 0.0
    %82 = vmatpush1.msra.mxu0 0.0
    %83 = vmatprep.subr.mxu0 0.0
    %84 = vmatpush1.msra.mxu0 0.0
    %85 = vmatprep.subr.mxu0 0.0
    %86 = vmatpush1.msra.mxu0 0.0
    %87 = vmatprep.subr.mxu0 0.0
    %88 = vmatpush1.msra.mxu0 0.0
    %89 = vmatprep.subr.mxu0 0.0
    %90 = vmatpush1.msra.mxu0 0.0
    %91 = vmatprep.subr.mxu0 0.0
    %92 = vmatpush1.msra.mxu0 0.0
    %93 = vmatprep.subr.mxu0 0.0
    %94 = vmatpush1.msra.mxu0 0.0
    %95 = vmatprep.subr.mxu0 0.0
    %96 = vmatpush1.msra.mxu0 0.0
    %97 = vmatprep.subr.mxu0 0.0
    %98 = vmatpush1.msra.mxu0 0.0
    %99 = vmatprep.subr.mxu0 0.0
    %100 = vmatpush1.msra.mxu0 0.0
    %101 = vmatprep.subr.mxu0 0.0
    %102 = vmatpush1.msra.mxu0 0.0
    %103 = vmatprep.subr.mxu0 0.0
    %104 = vmatpush1.msra.mxu0 0.0
    %105 = vmatprep.subr.mxu0 0.0
    %106 = vmatpush1.msra.mxu0 0.0
    %107 = vmatprep.subr.mxu0 0.0
    %108 = vmatpush1.msra.mxu0 0.0
    %109 = vmatprep.mubr.f32.mxu0 0.0
    %110 = vmatmul.mubr.f32.gmra.mrb[0].mxu0 %v40
    %v111 = vpop.f32.mrb[0].mxu0
    %v112 = vadd.f32 %v36, %v111
    %v113 = vpop.f32.mrb[0].mxu0
    %114 = vmatprep.mubr.f32.mxu0 0.0
    %115 = vmatmul.mubr.f32.gmra.mrb[0].mxu0 %v43
    %v116 = vpop.f32.mrb[0].mxu0
    %v117 = vadd.f32 %v36, %v116
    %v118 = vpop.f32.mrb[0].mxu0
    %119 = vdwg.mxu0
    %v120 = vmax.f32 %v112, 0.0
    %v121 = vmax.f32 %v117, 0.0
    %v122 = vld [vmem:[%s3] sm:$0xff]
    %v123 = vld [vmem:[%s3 + $0x8] sm:$0xff]
    %v124 = vld [vmem:[%s4] sm:$0x1]
    %v126 = vlaneseq
    %v127 = vshrl.u32 %v126, 7
    %v128 = vsub.s32 0, %v127
    %v129 = vrot.slane %v124, %v128
    %vm131 = vcmask 130048
    %v133 = vsel %vm131, %v120, 0
    %v136 = vsel %vm131, %v121, 0
    %138 = vmatprep.subr.mxu0 0.0
    %139 = vmatpush1.msra.mxu0 %v122
    %140 = vmatprep.subr.mxu0 0.0
    %141 = vmatpush1.msra.mxu0 %v123
    %142 = vmatprep.subr.mxu0 0.0
    %143 = vmatpush1.msra.mxu0 0.0
    %144 = vmatprep.subr.mxu0 0.0
    %145 = vmatpush1.msra.mxu0 0.0
    %146 = vmatprep.subr.mxu0 0.0
    %147 = vmatpush1.msra.mxu0 0.0
    %148 = vmatprep.subr.mxu0 0.0
    %149 = vmatpush1.msra.mxu0 0.0
    %150 = vmatprep.subr.mxu0 0.0
    %151 = vmatpush1.msra.mxu0 0.0
    %152 = vmatprep.subr.mxu0 0.0
    %153 = vmatpush1.msra.mxu0 0.0
    %154 = vmatprep.subr.mxu0 0.0
    %155 = vmatpush1.msra.mxu0 0.0
    %156 = vmatprep.subr.mxu0 0.0
    %157 = vmatpush1.msra.mxu0 0.0
    %158 = vmatprep.subr.mxu0 0.0
    %159 = vmatpush1.msra.mxu0 0.0
    %160 = vmatprep.subr.mxu0 0.0
    %161 = vmatpush1.msra.mxu0 0.0
    %162 = vmatprep.subr.mxu0 0.0
    %163 = vmatpush1.msra.mxu0 0.0
    %164 = vmatprep.subr.mxu0 0.0
    %165 = vmatpush1.msra.mxu0 0.0
    %166 = vmatprep.subr.mxu0 0.0
    %167 = vmatpush1.msra.mxu0 0.0
    %168 = vmatprep.subr.mxu0 0.0
    %169 = vmatpush1.msra.mxu0 0.0
    %170 = vmatprep.subr.mxu0 0.0
    %171 = vmatpush1.msra.mxu0 0.0
    %172 = vmatprep.subr.mxu0 0.0
    %173 = vmatpush1.msra.mxu0 0.0
    %174 = vmatprep.subr.mxu0 0.0
    %175 = vmatpush1.msra.mxu0 0.0
    %176 = vmatprep.subr.mxu0 0.0
    %177 = vmatpush1.msra.mxu0 0.0
    %178 = vmatprep.subr.mxu0 0.0
    %179 = vmatpush1.msra.mxu0 0.0
    %180 = vmatprep.subr.mxu0 0.0
    %181 = vmatpush1.msra.mxu0 0.0
    %182 = vmatprep.subr.mxu0 0.0
    %183 = vmatpush1.msra.mxu0 0.0
    %184 = vmatprep.subr.mxu0 0.0
    %185 = vmatpush1.msra.mxu0 0.0
    %186 = vmatprep.subr.mxu0 0.0
    %187 = vmatpush1.msra.mxu0 0.0
    %188 = vmatprep.subr.mxu0 0.0
    %189 = vmatpush1.msra.mxu0 0.0
    %190 = vmatprep.subr.mxu0 0.0
    %191 = vmatpush1.msra.mxu0 0.0
    %192 = vmatprep.subr.mxu0 0.0
    %193 = vmatpush1.msra.mxu0 0.0
    %194 = vmatprep.subr.mxu0 0.0
    %195 = vmatpush1.msra.mxu0 0.0
    %196 = vmatprep.subr.mxu0 0.0
    %197 = vmatpush1.msra.mxu0 0.0
    %198 = vmatprep.subr.mxu0 0.0
    %199 = vmatpush1.msra.mxu0 0.0
    %200 = vmatprep.subr.mxu0 0.0
    %201 = vmatpush1.msra.mxu0 0.0
    %202 = vmatprep.mubr.f32.mxu0 0.0
    %203 = vmatmul.mubr.f32.gmra.mrb[0].mxu0 %v133
    %v204 = vpop.f32.mrb[0].mxu0
    %v205 = vadd.f32 %v129, %v204
    %v206 = vpop.f32.mrb[0].mxu0
    %207 = vmatprep.mubr.f32.mxu0 0.0
    %208 = vmatmul.mubr.f32.gmra.mrb[0].mxu0 %v136
    %v209 = vpop.f32.mrb[0].mxu0
    %v210 = vadd.f32 %v129, %v209
    %v211 = vpop.f32.mrb[0].mxu0
    %212 = vdwg.mxu0
    %213 = vst.msk [vmem:[#allocation2] sm:$0xff] %vm38, %v205
    %214 = vst.msk [vmem:[#allocation2 + $0x8] sm:$0xff] %vm38, %v210
    // Predicated region
    $region22: #{tpu_custom_call.1} parent=1 // pred_check
      _
    $region23: #{tpu_custom_call.1} parent=1 // pred_check_branch
      %216 = sbr.rel (0) target = $region25
    $region24: #{tpu_custom_call.1} parent=1 // pred_region
      %s218 = ssub.s32 256, 256
      %219 = vsyncadd [#allocation3], %s218
      %s220 = sshll.u32 [#allocation2], 4
      %s221 = int_to_ptr.vmem [resolvable:$true] %s220
      %226 = dma.vmem_to_hbm [thread:$0]  %s221, 256, %s5, [#allocation3], 128, 128, 8
    $region25: #{tpu_custom_call.1} parent=1 // pred_fallthru
      _
    // Predicated region
    $region26: #{tpu_custom_call.1} parent=1 // pred_check
      _
    $region27: #{tpu_custom_call.1} parent=1 // pred_check_branch
      %228 = sbr.rel (0) target = $region29
    $region28: #{tpu_custom_call.1} parent=1 // pred_region
      %229 = dma.done [#allocation3], 256
    $region29: #{tpu_custom_call.1} parent=1 // pred_fallthru
      _
    %230 = vsyncpa [#allocation3], 1

</llo_original>
